<compile_context>
chip_gen: v6e
topology: v6e:2x2x1
jax: 0.10.0
libtpu: 0.0.40
codegen_flags: <defaults>
</compile_context>

<pallas_src>
import functools

import jax
import jax.numpy as jnp
from jax import lax
from jax.experimental import pallas as pl
from jax.experimental.pallas import tpu as pltpu


def _round_up(x, m):
    return (x + m - 1) // m * m


def _vmem_capacity_bytes():
    """Physical VMEM per TensorCore; conservative fallback if the query fails."""
    try:
        return int(pltpu.get_tpu_info().vmem_capacity_bytes)
    except Exception:
        return 64 * 1024 * 1024  # v7x-sized fallback: safe on every generation


# ----------------------------- kernels ------------------------------------- #


def _proj_kernel(x_ref, w_ref, b_ref, o_ref):
    """1-D grid over C: x resident, weight streamed as [tile_C, H]."""
    # Contract H of x [B, H] against H of W [tile_C, H] (torch nn.Linear layout,
    # no transpose materialized; weight-tile DMAs stay fully contiguous).
    acc = lax.dot_general(
        x_ref[...],
        w_ref[...],
        dimension_numbers=(((1,), (1,)), ((), ())),
        preferred_element_type=jnp.float32,
    )
    o_ref[...] = (acc + b_ref[...].astype(jnp.float32)).astype(o_ref.dtype)


def _proj_kernel_htiled(x_ref, w_ref, b_ref, o_ref, acc_ref):
    """2-D grid (C parallel, H innermost reduction) with an f32 accumulator."""
    k = pl.program_id(1)

    @pl.when(k == 0)
    def _():
        acc_ref[...] = jnp.zeros_like(acc_ref)

    acc_ref[...] += lax.dot_general(
        x_ref[...],
        w_ref[...],
        dimension_numbers=(((1,), (1,)), ((), ())),
        preferred_element_type=jnp.float32,
    )

    @pl.when(k == pl.num_programs(1) - 1)
    def _():
        o_ref[...] = (acc_ref[...] + b_ref[...].astype(jnp.float32)).astype(o_ref.dtype)


# ------------------------- tiling heuristics -------------------------------- #


def _pick_class_tile(hidden, num_classes, itemsize, per_buffer_budget):
    """Bytes-driven, 128-aligned tile of the class (C) axis of the weight."""
    if num_classes <= 128:
        return num_classes  # single full-extent block, no masking
    per_col = hidden * itemsize
    max_cols = max(128, (per_buffer_budget // per_col) // 128 * 128)
    tile = min(max_cols, _round_up(num_classes, 128))
    if tile >= num_classes:
        return num_classes  # one full block, no masked stores
    # Prefer >= 4 tiles (keeps both v7x TensorCores streaming and the pipeline
    # busy) as long as tiles stay at least 128 columns wide.
    if num_classes >= 4 * 128:
        tile = min(tile, max(128, (num_classes // 4) // 128 * 128))
    # Best-effort even tile count so the "parallel" axis splits evenly across
    # two TensorCores (v7x); only a handful of smaller candidates are checked.
    if pl.cdiv(num_classes, tile) % 2 == 1:
        for cand in range(tile - 128, max(tile - 4 * 128, 128) - 1, -128):
            if pl.cdiv(num_classes, cand) % 2 == 0:
                tile = cand
                break
    return tile


def _pick_h_tile(hidden, itemsize, per_buffer_budget):
    """128-multiple divisor of H so accumulation never sees padded garbage."""
    if hidden % 128 != 0:
        return None
    max_h = (per_buffer_budget // (128 * itemsize)) // 128 * 128
    h = min(hidden, max(128, max_h))
    while h > 128 and hidden % h != 0:
        h -= 128
    return h if hidden % h == 0 else None


# ------------------------------ wrapper ------------------------------------- #


@functools.partial(jax.jit, static_argnames=("class_tile",))
def category_projection(llm_last_hidden_state, weight, bias, *, class_tile=None):
    """Pallas equivalent of _CategoryProjection.forward.

    Args:
      llm_last_hidden_state: [B, S, H]
      weight: [C, H]  (torch nn.Linear weight layout — used as-is, no transpose)
      bias:   [C]
    Returns:
      logits: [B, 1, C] in the input dtype.
    """
    B, S, H = llm_last_hidden_state.shape
    C, Hw = weight.shape
    assert Hw == H, "weight must be [num_classes, hidden_size]"

    out_dtype = llm_last_hidden_state.dtype
    itemsize = weight.dtype.itemsize

    # VMEM sizing from hardware: scoped limit ~3/4 of physical VMEM; the
    # double-buffered weight stream is kept to <= ~2/3 of that limit (the rest
    # covers resident x, bias, output double-buffer and internal scratch).
    vmem_cap = _vmem_capacity_bytes()
    vmem_limit = min(vmem_cap * 3 // 4, 112 * 1024 * 1024)
    weight_buf_budget = vmem_limit // 3

    # Tiny XLA glue: last-token slice [B, H] and bias as a [1, C] lane-major row.
    cls_token = llm_last_hidden_state[:, -1, :]
    b2d = bias.reshape(1, C)

    cost = pl.CostEstimate(
        flops=2 * B * H * C,
        transcendentals=0,
        bytes_accessed=(
            C * H * itemsize                              # weight stream (dominant)
            + B * H * cls_token.dtype.itemsize
            + C * bias.dtype.itemsize
            + B * C * out_dtype.itemsize
        ),
    )

    needs_h_tiling = (128 * H * itemsize > weight_buf_budget) and H > 128
    h_tile = _pick_h_tile(H, itemsize, weight_buf_budget) if needs_h_tiling else None

    if h_tile is None:
        # ---- common path: 1-D grid over C, full-H weight tiles ----
        tc = class_tile if class_tile is not None else _pick_class_tile(
            H, C, itemsize, weight_buf_budget)
        grid = (pl.cdiv(C, tc),)
        out = pl.pallas_call(
            _proj_kernel,
            out_shape=jax.ShapeDtypeStruct((B, C), out_dtype),
            grid_spec=pltpu.PrefetchScalarGridSpec(
                num_scalar_prefetch=0,
                grid=grid,
                in_specs=[
                    # x stays resident across the whole grid (same block per step)
                    pl.BlockSpec((B, H), lambda j: (0, 0)),
                    # weight streamed tile-by-tile along C — double-buffered
                    pl.BlockSpec((tc, H), lambda j: (j, 0)),
                    pl.BlockSpec((1, tc), lambda j: (0, j)),
                ],
                out_specs=pl.BlockSpec((B, tc), lambda j: (0, j)),
            ),
            compiler_params=pltpu.CompilerParams(
                dimension_semantics=("parallel",),
                vmem_limit_bytes=vmem_limit,
            ),
            cost_estimate=cost,
        )(cls_token, weight, b2d)
    else:
        # ---- fallback: very large H; tile H too, accumulate in f32 scratch ----
        if class_tile is not None:
            tc = class_tile
        else:
            tc = max(128, (weight_buf_budget // (h_tile * itemsize)) // 128 * 128)
            tc = min(tc, C) if C <= 128 else min(tc, _round_up(C, 128))
        grid = (pl.cdiv(C, tc), H // h_tile)  # H innermost (reduction axis)
        out = pl.pallas_call(
            _proj_kernel_htiled,
            out_shape=jax.ShapeDtypeStruct((B, C), out_dtype),
            grid_spec=pltpu.PrefetchScalarGridSpec(
                num_scalar_prefetch=0,
                grid=grid,
                in_specs=[
                    pl.BlockSpec((B, h_tile), lambda j, k: (0, k)),
                    pl.BlockSpec((tc, h_tile), lambda j, k: (j, k)),
                    pl.BlockSpec((1, tc), lambda j, k: (0, j)),
                ],
                out_specs=pl.BlockSpec((B, tc), lambda j, k: (0, j)),
                scratch_shapes=[pltpu.VMEM((B, tc), jnp.float32)],
            ),
            compiler_params=pltpu.CompilerParams(
                dimension_semantics=("parallel", "arbitrary"),
                vmem_limit_bytes=vmem_limit,
            ),
            cost_estimate=cost,
        )(cls_token, weight, b2d)

    # Restore the [B, 1, C] shape from the PyTorch forward.
    return out.reshape(B, 1, C)


if __name__ == "__main__":
    # Small shapes consistent with the module: batch=2, seq=8, hidden=32, classes=16
    B, S, H, C = 2, 8, 32, 16

    key = jax.random.PRNGKey(0)
    k_x, k_w, k_b = jax.random.split(key, 3)

    x = jax.random.normal(k_x, (B, S, H), dtype=jnp.float32)
    # Deterministic nn.Linear-style init (uniform in [-1/sqrt(H), 1/sqrt(H)])
    bound = 1.0 / (H ** 0.5)
    weight = jax.random.uniform(k_w, (C, H), minval=-bound, maxval=bound,
                                dtype=jnp.float32)
    bias = jax.random.uniform(k_b, (C,), minval=-bound, maxval=bound,
                              dtype=jnp.float32)

    logits = category_projection(x, weight, bias)
    jax.block_until_ready(logits)

    # Reference check against plain JAX (same math as torch Linear on cls token).
    ref = x[:, -1:, :] @ weight.T + bias
    assert logits.shape == (B, 1, C)
    assert jnp.allclose(logits, ref, atol=1e-5, rtol=1e-5)

    print("KERNEL_OK")
</pallas_src>

<mosaic_0001>
module attributes {stable_mosaic.version = 11 : i64} {
  func.func @_proj_kernel(%arg0: i32, %arg1: memref<2x32xf32, #tpu.memory_space<vmem>>, %arg2: memref<16x32xf32, #tpu.memory_space<vmem>>, %arg3: memref<1x16xf32, #tpu.memory_space<vmem>>, %arg4: memref<2x16xf32, #tpu.memory_space<vmem>>) attributes {dimension_semantics = [#tpu.dimension_semantics<parallel>], iteration_bounds = array<i64: 1>, scalar_prefetch = 0 : i64, scratch_operands = 0 : i64, tpu.core_type = #tpu.core_type<tc>, window_params = [{pipeline_mode = #tpu.pipeline_mode<synchronous>, transform_indices = @transform_0, window_bounds = array<i64: 2, 32>}, {transform_indices = @transform_1, window_bounds = array<i64: 16, 32>}, {transform_indices = @transform_2, window_bounds = array<i64: 1, 16>}, {transform_indices = @transform_3, window_bounds = array<i64: 2, 16>}]} {
    %c0 = arith.constant 0 : index
    %c0_0 = arith.constant 0 : index
    %0 = vector.load %arg1[%c0, %c0_0] : memref<2x32xf32, #tpu.memory_space<vmem>>, vector<2x32xf32>
    %c0_1 = arith.constant 0 : index
    %c0_2 = arith.constant 0 : index
    %1 = vector.load %arg2[%c0_1, %c0_2] : memref<16x32xf32, #tpu.memory_space<vmem>>, vector<16x32xf32>
    %cst = arith.constant dense<0.000000e+00> : vector<2x16xf32>
    %2 = tpu.matmul %0, %1, %cst {dimension_numbers = #tpu.dot_dimension_numbers<[1], [1], [0], [0], [0, 0, 1, 0], [], []>} : vector<2x32xf32>, vector<16x32xf32>, vector<2x16xf32> -> vector<2x16xf32>
    %c0_3 = arith.constant 0 : index
    %c0_4 = arith.constant 0 : index
    %3 = vector.load %arg3[%c0_3, %c0_4] : memref<1x16xf32, #tpu.memory_space<vmem>>, vector<1x16xf32>
    %4 = vector.broadcast %3 : vector<1x16xf32> to vector<2x16xf32>
    %5 = arith.addf %2, %4 : vector<2x16xf32>
    %c0_5 = arith.constant 0 : index
    %c0_6 = arith.constant 0 : index
    %6 = vector.load %arg4[%c0_5, %c0_6] : memref<2x16xf32, #tpu.memory_space<vmem>>, vector<2x16xf32>
    tpu.vector_store %arg4[%c0_5, %c0_6], %5 {strides = array<i32>} : memref<2x16xf32, #tpu.memory_space<vmem>>, vector<2x16xf32>,
    return
  }
  func.func @transform_0(%arg0: i32) -> (i32, i32) {
    %c0_i32 = arith.constant 0 : i32
    %c0_i32_0 = arith.constant 0 : i32
    %c0_i32_1 = arith.constant 0 : i32
    return %c0_i32, %c0_i32_0 : i32, i32
  }
  func.func @transform_1(%arg0: i32) -> (i32, i32) {
    %c0_i32 = arith.constant 0 : i32
    %c0_i32_0 = arith.constant 0 : i32
    return %arg0, %c0_i32 : i32, i32
  }
  func.func @transform_2(%arg0: i32) -> (i32, i32) {
    %c0_i32 = arith.constant 0 : i32
    %c0_i32_0 = arith.constant 0 : i32
    return %c0_i32, %arg0 : i32, i32
  }
  func.func @transform_3(%arg0: i32) -> (i32, i32) {
    %c0_i32 = arith.constant 0 : i32
    %c0_i32_0 = arith.constant 0 : i32
    return %c0_i32, %arg0 : i32, i32
  }
}

</mosaic_0001>

<llo_original>
// kernel: category_projection.1
$region0: #{category_projection.1}
  #allocation0 [shape = 'u32[]', space=smem, size = 0x4, offset = 0x4, fixed_abs, tag = 'smem constant byte address 0x4 - core index']
  #allocation1 [shape = 'u32[144,128]{1,0:T(1,128)}', space=vmem, size = 0x12000, scoped, tag = 'internal scratch']
  %s0 = inlined_call_operand.vmem [shape: f32[2,32], index: 0, kind: input, shape index: {}]
  %s1 = inlined_call_operand.hbm [shape: f32[16,32], index: 1, kind: input, shape index: {}]
  %s2 = inlined_call_operand.vmem [shape: f32[1,16], index: 2, kind: input, shape index: {}]
  %s3 = inlined_call_operand.hbm [shape: f32[2,16], index: 3, kind: output, shape index: {}]
  %s4 = sld [smem:[#allocation0]]
  $region26: #{category_projection.1} parent=0
    _
  %s6 = ssub.s32 1, %s4
  %s7 = scalar_select 0, %s6, %s4
  $region1: #{category_projection.1} parent=0
    #allocation2 [shape = 'u8[8192]{0}', space=vmem, size = 0x2000, scoped, tag = 'input window, operand 1, single buffered']
    #allocation3 [shape = 's32[1]{0}', space=sflag, size = 0x4, scoped, tag = 'scoped memory for category_projection.1']
    #allocation4 [shape = 's32[1]{0}', space=sflag, size = 0x4, scoped, tag = 'scoped memory for category_projection.1']
    #allocation5 [shape = 'u8[1024]{0}', space=vmem, size = 0x400, scoped, tag = 'output window, operand 0, single buffered']
    %8 = vsyncpa [#allocation3], 0
    %9 = vsyncpa [#allocation4], 0
    // Predicated region
    $region2: #{category_projection.1} parent=1 // pred_check
      _
    $region3: #{category_projection.1} parent=1 // pred_check_branch
      %11 = sbr.rel (0) target = $region5
    $region4: #{category_projection.1} parent=1 // pred_region
      _
    $region5: #{category_projection.1} parent=1 // pred_fallthru
      _
    // Predicated region
    $region6: #{category_projection.1} parent=1 // pred_check
      _
    $region7: #{category_projection.1} parent=1 // pred_check_branch
      %13 = sbr.rel (0) target = $region9
    $region8: #{category_projection.1} parent=1 // pred_region
      %s15 = ssub.s32 256, 256
      %16 = vsyncadd [#allocation3], %s15
      %s17 = sshll.u32 [#allocation2], 4
      %s18 = int_to_ptr.vmem [resolvable:$true] %s17
      %23 = dma.hbm_to_vmem [thread:$0]  %s1, 256, %s18, [#allocation3], 128, 128, 8
    $region9: #{category_projection.1} parent=1 // pred_fallthru
      _
    // Predicated region
    $region10: #{category_projection.1} parent=1 // pred_check
      _
    $region11: #{category_projection.1} parent=1 // pred_check_branch
      %25 = sbr.rel (0) target = $region13
    $region12: #{category_projection.1} parent=1 // pred_region
      _
    $region13: #{category_projection.1} parent=1 // pred_fallthru
      _
    // Predicated region
    $region14: #{category_projection.1} parent=1 // pred_check
      _
    $region15: #{category_projection.1} parent=1 // pred_check_branch
      %27 = sbr.rel (0) target = $region17
    $region16: #{category_projection.1} parent=1 // pred_region
      %28 = dma.done [#allocation3], 256
    $region17: #{category_projection.1} parent=1 // pred_fallthru
      _
    %v29 = vld [vmem:[%s0] sm:$0x3]
    %v30 = vld [vmem:[#allocation2] sm:$0xff]
    %v31 = vld [vmem:[#allocation2 + $0x8] sm:$0xff]
    %v32 = vld [vmem:[%s2] sm:$0x1]
    %v34 = vlaneseq
    %v35 = vshrl.u32 %v34, 7
    %v36 = vsub.s32 0, %v35
    %v37 = vrot.slane %v32, %v36
    %vm39 = vcmask 261120
    %v41 = vsel %vm39, %v29, 0
    %v44 = vsel %vm39, %v30, 0
    %v47 = vsel %vm39, %v31, 0
    %49 = vmatprep.subr.mxu0 0.0
    %50 = vmatpush1.xpose.msra.mxu0 0.0
    %51 = vmatprep.subr.mxu0 0.0
    %52 = vmatpush1.xpose.msra.mxu0 0.0
    %53 = vmatprep.subr.mxu0 0.0
    %54 = vmatpush1.xpose.msra.mxu0 0.0
    %55 = vmatprep.subr.mxu0 0.0
    %56 = vmatpush1.xpose.msra.mxu0 0.0
    %57 = vmatprep.subr.mxu0 0.0
    %58 = vmatpush1.xpose.msra.mxu0 0.0
    %59 = vmatprep.subr.mxu0 0.0
    %60 = vmatpush1.xpose.msra.mxu0 0.0
    %61 = vmatprep.subr.mxu0 0.0
    %62 = vmatpush1.xpose.msra.mxu0 0.0
    %63 = vmatprep.subr.mxu0 0.0
    %64 = vmatpush1.xpose.msra.mxu0 0.0
    %65 = vmatprep.subr.mxu0 0.0
    %66 = vmatpush1.xpose.msra.mxu0 0.0
    %67 = vmatprep.subr.mxu0 0.0
    %68 = vmatpush1.xpose.msra.mxu0 0.0
    %69 = vmatprep.subr.mxu0 0.0
    %70 = vmatpush1.xpose.msra.mxu0 0.0
    %71 = vmatprep.subr.mxu0 0.0
    %72 = vmatpush1.xpose.msra.mxu0 0.0
    %73 = vmatprep.subr.mxu0 0.0
    %74 = vmatpush1.xpose.msra.mxu0 0.0
    %75 = vmatprep.subr.mxu0 0.0
    %76 = vmatpush1.xpose.msra.mxu0 0.0
    %77 = vmatprep.subr.mxu0 0.0
    %78 = vmatpush1.xpose.msra.mxu0 %v47
    %79 = vmatprep.subr.mxu0 0.0
    %80 = vmatpush1.xpose.msra.mxu0 %v44
    %81 = vmatprep.subr.mxu0 0.0
    %82 = vmatpush2.xpose.msra.mxu0 0.0
    %83 = vmatprep.subr.mxu0 0.0
    %84 = vmatpush2.xpose.msra.mxu0 0.0
    %85 = vmatprep.subr.mxu0 0.0
    %86 = vmatpush2.xpose.msra.mxu0 0.0
    %87 = vmatprep.subr.mxu0 0.0
    %88 = vmatpush2.xpose.msra.mxu0 0.0
    %89 = vmatprep.subr.mxu0 0.0
    %90 = vmatpush2.xpose.msra.mxu0 0.0
    %91 = vmatprep.subr.mxu0 0.0
    %92 = vmatpush2.xpose.msra.mxu0 0.0
    %93 = vmatprep.subr.mxu0 0.0
    %94 = vmatpush2.xpose.msra.mxu0 0.0
    %95 = vmatprep.subr.mxu0 0.0
    %96 = vmatpush2.xpose.msra.mxu0 0.0
    %97 = vmatprep.subr.mxu0 0.0
    %98 = vmatpush2.xpose.msra.mxu0 0.0
    %99 = vmatprep.subr.mxu0 0.0
    %100 = vmatpush2.xpose.msra.mxu0 0.0
    %101 = vmatprep.subr.mxu0 0.0
    %102 = vmatpush2.xpose.msra.mxu0 0.0
    %103 = vmatprep.subr.mxu0 0.0
    %104 = vmatpush2.xpose.msra.mxu0 0.0
    %105 = vmatprep.subr.mxu0 0.0
    %106 = vmatpush2.xpose.msra.mxu0 0.0
    %107 = vmatprep.subr.mxu0 0.0
    %108 = vmatpush2.xpose.msra.mxu0 0.0
    %109 = vmatprep.subr.mxu0 0.0
    %110 = vmatpush2.xpose.msra.mxu0 0.0
    %111 = vmatprep.subr.mxu0 0.0
    %112 = vmatpush2.xpose.msra.mxu0 0.0
    %113 = vmatprep.mubr.f32.mxu0 0.0
    %114 = vmatmul.mubr.f32.gmra.mxu0 %v41
    %v115 = vpop.f32.mrf.mxu0
    %v116 = vadd.f32 %v37, %v115
    %v117 = vpop.f32.mrf.mxu0
    %118 = vdwg.mxu0
    %vm119 = vcmask 123904
    %120 = vst.msk [vmem:[#allocation5] sm:$0x3] %vm119, %v116
    // Predicated region
    $region18: #{category_projection.1} parent=1 // pred_check
      _
    $region19: #{category_projection.1} parent=1 // pred_check_branch
      %122 = sbr.rel (0) target = $region21
    $region20: #{category_projection.1} parent=1 // pred_region
      %s124 = ssub.s32 32, 32
      %125 = vsyncadd [#allocation4], %s124
      %s127 = sshll.u32 [#allocation5], 4
      %s128 = int_to_ptr.vmem [resolvable:$true] %s127
      %130 = dma.vmem_to_hbm [thread:$0]  %s128, 32, %s3, [#allocation4]
    $region21: #{category_projection.1} parent=1 // pred_fallthru
      _
    // Predicated region
    $region22: #{category_projection.1} parent=1 // pred_check
      _
    $region23: #{category_projection.1} parent=1 // pred_check_branch
      %132 = sbr.rel (0) target = $region25
    $region24: #{category_projection.1} parent=1 // pred_region
      %133 = dma.done [#allocation4], 32
    $region25: #{category_projection.1} parent=1 // pred_fallthru
      _
    %134 = vsyncpa [#allocation3], 1
    %135 = vsyncpa [#allocation4], 1

</llo_original>
